<compile_context>
chip_gen: v5e
topology: v5e:2x2
jax: 0.10.0
libtpu: 0.0.40
codegen_flags: <defaults>
</compile_context>

<pallas_src>
import functools

import jax
import jax.numpy as jnp
from jax.experimental import pallas as pl
from jax.experimental.pallas import tpu as pltpu

HIDDEN = 128
LANE = 128  # TPU lane width


def dqn_kernel(x_ref, w1_ref, b1_ref, w2_ref, b2_ref, w3_ref, b3_ref, o_ref):
    # Read biases once (f32, shape (1, N)); rely on implicit broadcasting.
    b1 = b1_ref[...]
    b2 = b2_ref[...]
    b3 = b3_ref[...]

    # fc1 + relu: bf16 operands on the MXU, f32 accumulation, f32 epilogue.
    h1 = jnp.dot(x_ref[...], w1_ref[...], preferred_element_type=jnp.float32)
    h1 = jnp.maximum(h1 + b1, 0.0).astype(jnp.bfloat16)

    # fc2 + relu
    h2 = jnp.dot(h1, w2_ref[...], preferred_element_type=jnp.float32)
    h2 = jnp.maximum(h2 + b2, 0.0).astype(jnp.bfloat16)

    # fc3 (no activation); lane-dense (TB, 128) store.
    out = jnp.dot(h2, w3_ref[...], preferred_element_type=jnp.float32)
    o_ref[...] = (out + b3).astype(o_ref.dtype)


def _round_up(n, m):
    return ((n + m - 1) // m) * m


def _pad_to(arr, shape):
    pads = [(0, t - s) for s, t in zip(arr.shape, shape)]
    if all(p == (0, 0) for p in pads):
        return arr
    return jnp.pad(arr, pads)


@functools.partial(jax.jit, static_argnames="tb")
def dqn_forward(x, params, tb=128):
    """x: (B, n_observations) float32. params: transposed weights (in, out) + (1, out) biases."""
    B, n_obs = x.shape
    H = params["w1"].shape[1]
    n_actions = params["w3"].shape[1]

    # Pad feature / action dims to full 128-lane tiles, batch to a tile multiple.
    K_pad = _round_up(max(n_obs, LANE), LANE)
    N_pad = _round_up(max(n_actions, LANE), LANE)
    B_pad = _round_up(max(B, tb), tb)

    # bf16 operands for the MXU; biases stay f32 (epilogue runs in f32).
    x_p = _pad_to(x, (B_pad, K_pad)).astype(jnp.bfloat16)
    w1 = _pad_to(params["w1"], (K_pad, H)).astype(jnp.bfloat16)
    w2 = params["w2"].astype(jnp.bfloat16)
    w3 = _pad_to(params["w3"], (H, N_pad)).astype(jnp.bfloat16)
    b1 = params["b1"].astype(jnp.float32)
    b2 = params["b2"].astype(jnp.float32)
    b3 = _pad_to(params["b3"], (1, N_pad)).astype(jnp.float32)

    grid = (B_pad // tb,)

    resident = lambda shape: pl.BlockSpec(shape, lambda i: (0, 0))

    out_padded = pl.pallas_call(
        dqn_kernel,
        out_shape=jax.ShapeDtypeStruct((B_pad, N_pad), jnp.float32),
        grid=grid,
        in_specs=[
            pl.BlockSpec((tb, K_pad), lambda i: (i, 0)),   # x: batch-tiled
            resident(w1.shape), resident(b1.shape),        # weights/biases resident
            resident(w2.shape), resident(b2.shape),
            resident(w3.shape), resident(b3.shape),
        ],
        out_specs=pl.BlockSpec((tb, N_pad), lambda i: (i, 0)),
        compiler_params=pltpu.CompilerParams(
            dimension_semantics=("parallel",),
        ),
    )(x_p, w1, b1, w2, b2, w3, b3)

    # Strip batch / action padding so downstream argmax never sees dead lanes.
    return out_padded[:B, :n_actions]


def init_dqn_params(key, n_observations, n_actions, hidden=HIDDEN):
    """Mimics PyTorch nn.Linear default init: U[-1/sqrt(fan_in), 1/sqrt(fan_in)].
    Weights stored already transposed: (in_features, out_features)."""
    keys = jax.random.split(key, 6)

    def linear(kw, kb, fan_in, fan_out):
        bound = 1.0 / jnp.sqrt(jnp.float32(fan_in))
        w = jax.random.uniform(kw, (fan_in, fan_out), jnp.float32, -bound, bound)
        b = jax.random.uniform(kb, (1, fan_out), jnp.float32, -bound, bound)
        return w, b

    w1, b1 = linear(keys[0], keys[1], n_observations, hidden)
    w2, b2 = linear(keys[2], keys[3], hidden, hidden)
    w3, b3 = linear(keys[4], keys[5], hidden, n_actions)
    return {"w1": w1, "b1": b1, "w2": w2, "b2": b2, "w3": w3, "b3": b3}


def dqn_reference_f32(x, params):
    h1 = jnp.maximum(x @ params["w1"] + params["b1"], 0.0)
    h2 = jnp.maximum(h1 @ params["w2"] + params["b2"], 0.0)
    return h2 @ params["w3"] + params["b3"]


def dqn_reference_bf16(x, params):
    """Reference with the same bf16-operand / f32-accumulate numerics as the kernel."""
    xb = x.astype(jnp.bfloat16)
    w1 = params["w1"].astype(jnp.bfloat16)
    w2 = params["w2"].astype(jnp.bfloat16)
    w3 = params["w3"].astype(jnp.bfloat16)
    h1 = jnp.dot(xb, w1, preferred_element_type=jnp.float32) + params["b1"]
    h1 = jnp.maximum(h1, 0.0).astype(jnp.bfloat16)
    h2 = jnp.dot(h1, w2, preferred_element_type=jnp.float32) + params["b2"]
    h2 = jnp.maximum(h2, 0.0).astype(jnp.bfloat16)
    return jnp.dot(h2, w3, preferred_element_type=jnp.float32) + params["b3"]


if __name__ == "__main__":
    # LunarLander-v2: 8-dim observation, 4 discrete actions.
    # Use a replay-buffer-sized batch so the batch grid is actually exercised.
    n_observations, n_actions, batch = 8, 4, 256

    key = jax.random.PRNGKey(0)
    key_params, key_x = jax.random.split(key)
    params = init_dqn_params(key_params, n_observations, n_actions)
    x = jax.random.normal(key_x, (batch, n_observations), jnp.float32)

    out = dqn_forward(x, params, tb=128)
    out = jax.block_until_ready(out)
    assert out.shape == (batch, n_actions)

    # Tight check vs a numerics-matched (bf16 operand / f32 accum) reference.
    ref_bf16 = dqn_reference_bf16(x, params)
    assert jnp.allclose(out, ref_bf16, atol=1e-3, rtol=1e-3)

    # Loose semantic check vs the full-f32 PyTorch-equivalent forward.
    ref_f32 = dqn_reference_f32(x, params)
    assert jnp.allclose(out, ref_f32, atol=5e-2, rtol=5e-2)

    print("KERNEL_OK")
</pallas_src>

<mosaic_0001>
module attributes {stable_mosaic.version = 11 : i64} {
  func.func @dqn_kernel(%arg0: i32, %arg1: memref<128x128xbf16, #tpu.memory_space<vmem>>, %arg2: memref<128x128xbf16, #tpu.memory_space<vmem>>, %arg3: memref<1x128xf32, #tpu.memory_space<vmem>>, %arg4: memref<128x128xbf16, #tpu.memory_space<vmem>>, %arg5: memref<1x128xf32, #tpu.memory_space<vmem>>, %arg6: memref<128x128xbf16, #tpu.memory_space<vmem>>, %arg7: memref<1x128xf32, #tpu.memory_space<vmem>>, %arg8: memref<128x128xf32, #tpu.memory_space<vmem>>) attributes {dimension_semantics = [#tpu.dimension_semantics<parallel>], iteration_bounds = array<i64: 2>, scalar_prefetch = 0 : i64, scratch_operands = 0 : i64, tpu.core_type = #tpu.core_type<tc>, window_params = [{transform_indices = @transform_0, window_bounds = array<i64: 128, 128>}, {pipeline_mode = #tpu.pipeline_mode<synchronous>, transform_indices = @transform_1, window_bounds = array<i64: 128, 128>}, {pipeline_mode = #tpu.pipeline_mode<synchronous>, transform_indices = @transform_2, window_bounds = array<i64: 1, 128>}, {pipeline_mode = #tpu.pipeline_mode<synchronous>, transform_indices = @transform_3, window_bounds = array<i64: 128, 128>}, {pipeline_mode = #tpu.pipeline_mode<synchronous>, transform_indices = @transform_4, window_bounds = array<i64: 1, 128>}, {pipeline_mode = #tpu.pipeline_mode<synchronous>, transform_indices = @transform_5, window_bounds = array<i64: 128, 128>}, {pipeline_mode = #tpu.pipeline_mode<synchronous>, transform_indices = @transform_6, window_bounds = array<i64: 1, 128>}, {transform_indices = @transform_7, window_bounds = array<i64: 128, 128>}]} {
    %c0 = arith.constant 0 : index
    %c0_0 = arith.constant 0 : index
    %0 = vector.load %arg3[%c0, %c0_0] : memref<1x128xf32, #tpu.memory_space<vmem>>, vector<1x128xf32>
    %c0_1 = arith.constant 0 : index
    %c0_2 = arith.constant 0 : index
    %1 = vector.load %arg5[%c0_1, %c0_2] : memref<1x128xf32, #tpu.memory_space<vmem>>, vector<1x128xf32>
    %c0_3 = arith.constant 0 : index
    %c0_4 = arith.constant 0 : index
    %2 = vector.load %arg7[%c0_3, %c0_4] : memref<1x128xf32, #tpu.memory_space<vmem>>, vector<1x128xf32>
    %c0_5 = arith.constant 0 : index
    %c0_6 = arith.constant 0 : index
    %3 = vector.load %arg1[%c0_5, %c0_6] : memref<128x128xbf16, #tpu.memory_space<vmem>>, vector<128x128xbf16>
    %c0_7 = arith.constant 0 : index
    %c0_8 = arith.constant 0 : index
    %4 = vector.load %arg2[%c0_7, %c0_8] : memref<128x128xbf16, #tpu.memory_space<vmem>>, vector<128x128xbf16>
    %cst = arith.constant dense<0.000000e+00> : vector<128x128xf32>
    %5 = tpu.matmul %3, %4, %cst {dimension_numbers = #tpu.dot_dimension_numbers<[1], [0], [0], [1], [0, 0, 1, 1], [], []>} : vector<128x128xbf16>, vector<128x128xbf16>, vector<128x128xf32> -> vector<128x128xf32>
    %6 = vector.broadcast %0 : vector<1x128xf32> to vector<128x128xf32>
    %7 = arith.addf %5, %6 : vector<128x128xf32>
    %cst_9 = arith.constant 0.000000e+00 : f32
    %8 = vector.broadcast %cst_9 : f32 to vector<128x128xf32>
    %9 = arith.maximumf %7, %8 : vector<128x128xf32>
    %10 = arith.truncf %9 : vector<128x128xf32> to vector<128x128xbf16>
    %c0_10 = arith.constant 0 : index
    %c0_11 = arith.constant 0 : index
    %11 = vector.load %arg4[%c0_10, %c0_11] : memref<128x128xbf16, #tpu.memory_space<vmem>>, vector<128x128xbf16>
    %cst_12 = arith.constant dense<0.000000e+00> : vector<128x128xf32>
    %12 = tpu.matmul %10, %11, %cst_12 {dimension_numbers = #tpu.dot_dimension_numbers<[1], [0], [0], [1], [0, 0, 1, 1], [], []>} : vector<128x128xbf16>, vector<128x128xbf16>, vector<128x128xf32> -> vector<128x128xf32>
    %13 = vector.broadcast %1 : vector<1x128xf32> to vector<128x128xf32>
    %14 = arith.addf %12, %13 : vector<128x128xf32>
    %cst_13 = arith.constant 0.000000e+00 : f32
    %15 = vector.broadcast %cst_13 : f32 to vector<128x128xf32>
    %16 = arith.maximumf %14, %15 : vector<128x128xf32>
    %17 = arith.truncf %16 : vector<128x128xf32> to vector<128x128xbf16>
    %c0_14 = arith.constant 0 : index
    %c0_15 = arith.constant 0 : index
    %18 = vector.load %arg6[%c0_14, %c0_15] : memref<128x128xbf16, #tpu.memory_space<vmem>>, vector<128x128xbf16>
    %cst_16 = arith.constant dense<0.000000e+00> : vector<128x128xf32>
    %19 = tpu.matmul %17, %18, %cst_16 {dimension_numbers = #tpu.dot_dimension_numbers<[1], [0], [0], [1], [0, 0, 1, 1], [], []>} : vector<128x128xbf16>, vector<128x128xbf16>, vector<128x128xf32> -> vector<128x128xf32>
    %20 = vector.broadcast %2 : vector<1x128xf32> to vector<128x128xf32>
    %21 = arith.addf %19, %20 : vector<128x128xf32>
    %c0_17 = arith.constant 0 : index
    %c0_18 = arith.constant 0 : index
    %22 = vector.load %arg8[%c0_17, %c0_18] : memref<128x128xf32, #tpu.memory_space<vmem>>, vector<128x128xf32>
    tpu.vector_store %arg8[%c0_17, %c0_18], %21 {strides = array<i32>} : memref<128x128xf32, #tpu.memory_space<vmem>>, vector<128x128xf32>,
    return
  }
  func.func @transform_0(%arg0: i32) -> (i32, i32) {
    %c0_i32 = arith.constant 0 : i32
    %c0_i32_0 = arith.constant 0 : i32
    return %arg0, %c0_i32 : i32, i32
  }
  func.func @transform_1(%arg0: i32) -> (i32, i32) {
    %c0_i32 = arith.constant 0 : i32
    %c0_i32_0 = arith.constant 0 : i32
    %c0_i32_1 = arith.constant 0 : i32
    return %c0_i32, %c0_i32_0 : i32, i32
  }
  func.func @transform_2(%arg0: i32) -> (i32, i32) {
    %c0_i32 = arith.constant 0 : i32
    %c0_i32_0 = arith.constant 0 : i32
    %c0_i32_1 = arith.constant 0 : i32
    return %c0_i32, %c0_i32_0 : i32, i32
  }
  func.func @transform_3(%arg0: i32) -> (i32, i32) {
    %c0_i32 = arith.constant 0 : i32
    %c0_i32_0 = arith.constant 0 : i32
    %c0_i32_1 = arith.constant 0 : i32
    return %c0_i32, %c0_i32_0 : i32, i32
  }
  func.func @transform_4(%arg0: i32) -> (i32, i32) {
    %c0_i32 = arith.constant 0 : i32
    %c0_i32_0 = arith.constant 0 : i32
    %c0_i32_1 = arith.constant 0 : i32
    return %c0_i32, %c0_i32_0 : i32, i32
  }
  func.func @transform_5(%arg0: i32) -> (i32, i32) {
    %c0_i32 = arith.constant 0 : i32
    %c0_i32_0 = arith.constant 0 : i32
    %c0_i32_1 = arith.constant 0 : i32
    return %c0_i32, %c0_i32_0 : i32, i32
  }
  func.func @transform_6(%arg0: i32) -> (i32, i32) {
    %c0_i32 = arith.constant 0 : i32
    %c0_i32_0 = arith.constant 0 : i32
    %c0_i32_1 = arith.constant 0 : i32
    return %c0_i32, %c0_i32_0 : i32, i32
  }
  func.func @transform_7(%arg0: i32) -> (i32, i32) {
    %c0_i32 = arith.constant 0 : i32
    %c0_i32_0 = arith.constant 0 : i32
    return %arg0, %c0_i32 : i32, i32
  }
}

</mosaic_0001>

<llo_original>
// kernel: dqn_forward.1
$region0: #{dqn_forward.1}
  #allocation0 [shape = 'u32[]', space=smem, size = 0x4, offset = 0x4, fixed_abs, tag = 'smem constant byte address 0x4 - core index']
  #allocation1 [shape = 'u32[72,128]{1,0:T(1,128)}', space=vmem, size = 0x9000, scoped, tag = 'internal scratch']
  %s0 = inlined_call_operand.vmem [shape: bf16[256,128], index: 0, kind: input, shape index: {}]
  %s1 = inlined_call_operand.vmem [shape: bf16[128,128], index: 1, kind: input, shape index: {}]
  %s2 = inlined_call_operand.vmem [shape: f32[1,128], index: 2, kind: input, shape index: {}]
  %s3 = inlined_call_operand.vmem [shape: bf16[128,128], index: 3, kind: input, shape index: {}]
  %s4 = inlined_call_operand.vmem [shape: f32[1,128], index: 4, kind: input, shape index: {}]
  %s5 = inlined_call_operand.vmem [shape: bf16[128,128], index: 5, kind: input, shape index: {}]
  %s6 = inlined_call_operand.vmem [shape: f32[1,128], index: 6, kind: input, shape index: {}]
  %s7 = inlined_call_operand.vmem [shape: f32[256,128], index: 7, kind: output, shape index: {}]
  %s8 = sld [smem:[#allocation0]]
  $region61: #{dqn_forward.1} parent=0
    _
  %s10 = ssub.s32 1, %s8
  %s11 = scalar_select 0, %s10, %s8
  loop: start=0, step=1, limit=4
  $region2: #{dqn_forward.1} parent=0 // loop_pre_header
    _
  $region3: #{dqn_forward.1} parent=0 // loop_header
    %s13 = sphi 0, %s17
    %p14 = scmp.ge.s32.totalorder %s13, 4
    %s23 = sphi 0, %s25
    %s26 = sphi 0, %s23
    %s27 = sphi 0, %s26
    %s43 = sphi 0, %s27
    %s47 = sphi 0, %s47
    %s49 = sphi 0, %s47
    %s50 = sphi 0, %s49
    %s64 = sphi 0, %s50
    %s68 = sphi 0, %s68
    %s70 = sphi 0, %s68
    %s71 = sphi 0, %s70
    %s85 = sphi 0, %s71
    %s89 = sphi 0, %s89
    %s91 = sphi 0, %s89
    %s92 = sphi 0, %s91
    %s106 = sphi 0, %s92
    %s110 = sphi 0, %s110
    %s112 = sphi 0, %s110
    %s113 = sphi 0, %s112
    %s127 = sphi 0, %s113
    %s131 = sphi 0, %s131
    %s133 = sphi 0, %s131
    %s134 = sphi 0, %s133
    %s148 = sphi 0, %s134
    %s152 = sphi 0, %s152
    %s154 = sphi 0, %s152
    %s155 = sphi 0, %s154
    %s169 = sphi 0, %s155
    %s175 = sphi 0, %s177
    %s178 = sphi 0, %s175
    %s179 = sphi 0, %s178
    %s195 = sphi 0, %s179
  $region4: #{dqn_forward.1} parent=0 // loop_header_branch
    %16 = sbr.rel (%p14) target = $region8
  $region5: #{dqn_forward.1} parent=0 // loop_body
    %s18 = ssub.s32 %s13, 1
    %s19 = ssub.s32 %s13, 2
    %s20 = sadd.s32 %s13, 1
    %s21 = ssub.s32 %s13, %s20
    %p22 = scmp.eq.s32.totalorder %s21, 0
    %s24 = sadd.s32 %s23, 1
    %s25 = scalar_select %p22, %s23, %s24
    %p28 = pneg %p22
    %p29 = scmp.eq.s32.totalorder %s13, 1
    %p30 = por %p28, %p29
    %p31 = scmp.ne.s32.totalorder %s23, %s26
    %p32 = scmp.eq.s32.totalorder %s13, 0
    %p33 = por %p31, %p32
    %p34 = scmp.ne.s32.totalorder %s23, %s26
    %p35 = scmp.eq.s32.totalorder %s18, 1
    %p36 = por %p34, %p35
    %p37 = scmp.ne.s32.totalorder %s26, %s27
    %p38 = scmp.eq.s32.totalorder %s18, 0
    %p39 = por %p37, %p38
    %p40 = scmp.ne.s32.totalorder %s26, %s27
    %p41 = scmp.eq.s32.totalorder %s19, 1
    %p42 = por %p40, %p41
    %p44 = scmp.ne.s32.totalorder %s27, %s43
    %p45 = scmp.eq.s32.totalorder %s19, 0
    %p46 = por %p44, %p45
    %s48 = sadd.s32 %s47, 1
    %p51 = scmp.eq.s32.totalorder %s13, 1
    %p52 = scmp.ne.s32.totalorder %s47, %s49
    %p53 = scmp.eq.s32.totalorder %s13, 0
    %p54 = por %p52, %p53
    %p55 = scmp.ne.s32.totalorder %s47, %s49
    %p56 = scmp.eq.s32.totalorder %s18, 1
    %p57 = por %p55, %p56
    %p58 = scmp.ne.s32.totalorder %s49, %s50
    %p59 = scmp.eq.s32.totalorder %s18, 0
    %p60 = por %p58, %p59
    %p61 = scmp.ne.s32.totalorder %s49, %s50
    %p62 = scmp.eq.s32.totalorder %s19, 1
    %p63 = por %p61, %p62
    %p65 = scmp.ne.s32.totalorder %s50, %s64
    %p66 = scmp.eq.s32.totalorder %s19, 0
    %p67 = por %p65, %p66
    %s69 = sadd.s32 %s68, 1
    %p72 = scmp.eq.s32.totalorder %s13, 1
    %p73 = scmp.ne.s32.totalorder %s68, %s70
    %p74 = scmp.eq.s32.totalorder %s13, 0
    %p75 = por %p73, %p74
    %p76 = scmp.ne.s32.totalorder %s68, %s70
    %p77 = scmp.eq.s32.totalorder %s18, 1
    %p78 = por %p76, %p77
    %p79 = scmp.ne.s32.totalorder %s70, %s71
    %p80 = scmp.eq.s32.totalorder %s18, 0
    %p81 = por %p79, %p80
    %p82 = scmp.ne.s32.totalorder %s70, %s71
    %p83 = scmp.eq.s32.totalorder %s19, 1
    %p84 = por %p82, %p83
    %p86 = scmp.ne.s32.totalorder %s71, %s85
    %p87 = scmp.eq.s32.totalorder %s19, 0
    %p88 = por %p86, %p87
    %s90 = sadd.s32 %s89, 1
    %p93 = scmp.eq.s32.totalorder %s13, 1
    %p94 = scmp.ne.s32.totalorder %s89, %s91
    %p95 = scmp.eq.s32.totalorder %s13, 0
    %p96 = por %p94, %p95
    %p97 = scmp.ne.s32.totalorder %s89, %s91
    %p98 = scmp.eq.s32.totalorder %s18, 1
    %p99 = por %p97, %p98
    %p100 = scmp.ne.s32.totalorder %s91, %s92
    %p101 = scmp.eq.s32.totalorder %s18, 0
    %p102 = por %p100, %p101
    %p103 = scmp.ne.s32.totalorder %s91, %s92
    %p104 = scmp.eq.s32.totalorder %s19, 1
    %p105 = por %p103, %p104
    %p107 = scmp.ne.s32.totalorder %s92, %s106
    %p108 = scmp.eq.s32.totalorder %s19, 0
    %p109 = por %p107, %p108
    %s111 = sadd.s32 %s110, 1
    %p114 = scmp.eq.s32.totalorder %s13, 1
    %p115 = scmp.ne.s32.totalorder %s110, %s112
    %p116 = scmp.eq.s32.totalorder %s13, 0
    %p117 = por %p115, %p116
    %p118 = scmp.ne.s32.totalorder %s110, %s112
    %p119 = scmp.eq.s32.totalorder %s18, 1
    %p120 = por %p118, %p119
    %p121 = scmp.ne.s32.totalorder %s112, %s113
    %p122 = scmp.eq.s32.totalorder %s18, 0
    %p123 = por %p121, %p122
    %p124 = scmp.ne.s32.totalorder %s112, %s113
    %p125 = scmp.eq.s32.totalorder %s19, 1
    %p126 = por %p124, %p125
    %p128 = scmp.ne.s32.totalorder %s113, %s127
    %p129 = scmp.eq.s32.totalorder %s19, 0
    %p130 = por %p128, %p129
    %s132 = sadd.s32 %s131, 1
    %p135 = scmp.eq.s32.totalorder %s13, 1
    %p136 = scmp.ne.s32.totalorder %s131, %s133
    %p137 = scmp.eq.s32.totalorder %s13, 0
    %p138 = por %p136, %p137
    %p139 = scmp.ne.s32.totalorder %s131, %s133
    %p140 = scmp.eq.s32.totalorder %s18, 1
    %p141 = por %p139, %p140
    %p142 = scmp.ne.s32.totalorder %s133, %s134
    %p143 = scmp.eq.s32.totalorder %s18, 0
    %p144 = por %p142, %p143
    %p145 = scmp.ne.s32.totalorder %s133, %s134
    %p146 = scmp.eq.s32.totalorder %s19, 1
    %p147 = por %p145, %p146
    %p149 = scmp.ne.s32.totalorder %s134, %s148
    %p150 = scmp.eq.s32.totalorder %s19, 0
    %p151 = por %p149, %p150
    %s153 = sadd.s32 %s152, 1
    %p156 = scmp.eq.s32.totalorder %s13, 1
    %p157 = scmp.ne.s32.totalorder %s152, %s154
    %p158 = scmp.eq.s32.totalorder %s13, 0
    %p159 = por %p157, %p158
    %p160 = scmp.ne.s32.totalorder %s152, %s154
    %p161 = scmp.eq.s32.totalorder %s18, 1
    %p162 = por %p160, %p161
    %p163 = scmp.ne.s32.totalorder %s154, %s155
    %p164 = scmp.eq.s32.totalorder %s18, 0
    %p165 = por %p163, %p164
    %p166 = scmp.ne.s32.totalorder %s154, %s155
    %p167 = scmp.eq.s32.totalorder %s19, 1
    %p168 = por %p166, %p167
    %p170 = scmp.ne.s32.totalorder %s155, %s169
    %p171 = scmp.eq.s32.totalorder %s19, 0
    %p172 = por %p170, %p171
    %s173 = ssub.s32 %s13, %s20
    %p174 = scmp.eq.s32.totalorder %s173, 0
    %s176 = sadd.s32 %s175, 1
    %s177 = scalar_select %p174, %s175, %s176
    %p180 = pneg %p174
    %p181 = scmp.eq.s32.totalorder %s13, 1
    %p182 = por %p180, %p181
    %p183 = scmp.ne.s32.totalorder %s175, %s178
    %p184 = scmp.eq.s32.totalorder %s13, 0
    %p185 = por %p183, %p184
    %p186 = scmp.ne.s32.totalorder %s175, %s178
    %p187 = scmp.eq.s32.totalorder %s18, 1
    %p188 = por %p186, %p187
    %p189 = scmp.ne.s32.totalorder %s178, %s179
    %p190 = scmp.eq.s32.totalorder %s18, 0
    %p191 = por %p189, %p190
    %p192 = scmp.ne.s32.totalorder %s178, %s179
    %p193 = scmp.eq.s32.totalorder %s19, 1
    %p194 = por %p192, %p193
    %p196 = scmp.ne.s32.totalorder %s179, %s195
    %p197 = scmp.eq.s32.totalorder %s19, 0
    %p198 = por %p196, %p197
    %p199 = scmp.le.s32.totalorder 1, %s13
    %p200 = scmp.lt.s32.totalorder %s13, 3
    %p201 = pnand %p199, %p200
    %p202 = pneg %p201
    // Predicated region
    $region9: #{dqn_forward.1} parent=5 // pred_check
      _
    $region10: #{dqn_forward.1} parent=5 // pred_check_branch
      %204 = sbr.rel (%p201) target = $region12
    $region11: #{dqn_forward.1} parent=5 // pred_region
      %s205 = ssub.s32 %s13, 1
      // Predicated region
      $region13: #{dqn_forward.1} parent=11 // pred_check
        %p206 = pneg %p60
      $region14: #{dqn_forward.1} parent=11 // pred_check_branch
        %208 = sbr.rel (%p206) target = $region16
      $region15: #{dqn_forward.1} parent=11 // pred_region
        _
      $region16: #{dqn_forward.1} parent=11 // pred_fallthru
        _
      // Predicated region
      $region17: #{dqn_forward.1} parent=11 // pred_check
        %p209 = pneg %p81
      $region18: #{dqn_forward.1} parent=11 // pred_check_branch
        %211 = sbr.rel (%p209) target = $region20
      $region19: #{dqn_forward.1} parent=11 // pred_region
        _
      $region20: #{dqn_forward.1} parent=11 // pred_fallthru
        _
      // Predicated region
      $region21: #{dqn_forward.1} parent=11 // pred_check
        %p212 = pneg %p102
      $region22: #{dqn_forward.1} parent=11 // pred_check_branch
        %214 = sbr.rel (%p212) target = $region24
      $region23: #{dqn_forward.1} parent=11 // pred_region
        _
      $region24: #{dqn_forward.1} parent=11 // pred_fallthru
        _
      // Predicated region
      $region25: #{dqn_forward.1} parent=11 // pred_check
        %p215 = pneg %p123
      $region26: #{dqn_forward.1} parent=11 // pred_check_branch
        %217 = sbr.rel (%p215) target = $region28
      $region27: #{dqn_forward.1} parent=11 // pred_region
        _
      $region28: #{dqn_forward.1} parent=11 // pred_fallthru
        _
      // Predicated region
      $region29: #{dqn_forward.1} parent=11 // pred_check
        %p218 = pneg %p144
      $region30: #{dqn_forward.1} parent=11 // pred_check_branch
        %220 = sbr.rel (%p218) target = $region32
      $region31: #{dqn_forward.1} parent=11 // pred_region
        _
      $region32: #{dqn_forward.1} parent=11 // pred_fallthru
        _
      // Predicated region
      $region33: #{dqn_forward.1} parent=11 // pred_check
        %p221 = pneg %p165
      $region34: #{dqn_forward.1} parent=11 // pred_check_branch
        %223 = sbr.rel (%p221) target = $region36
      $region35: #{dqn_forward.1} parent=11 // pred_region
        _
      $region36: #{dqn_forward.1} parent=11 // pred_fallthru
        _
    $region12: #{dqn_forward.1} parent=5 // pred_fallthru
      _
    %p224 = scmp.lt.s32.totalorder %s13, 2
    // Predicated region
    $region37: #{dqn_forward.1} parent=5 // pred_check
      %p225 = pneg %p224
    $region38: #{dqn_forward.1} parent=5 // pred_check_branch
      %227 = sbr.rel (%p225) target = $region40
    $region39: #{dqn_forward.1} parent=5 // pred_region
      // Predicated region
      $region41: #{dqn_forward.1} parent=39 // pred_check
        %p228 = pneg %p33
      $region42: #{dqn_forward.1} parent=39 // pred_check_branch
        %230 = sbr.rel (%p228) target = $region44
      $region43: #{dqn_forward.1} parent=39 // pred_region
        %s231 = smul.u32 16, %s13
        %p232 = scmp.lt.s32.totalorder %s231, 31
        %s233 = scalar_select %p232, %s231, 31
        %s234 = smul.addr %s233, 4
        %s235 = scalar_lea.vmem %s0, %s234
        %s236 = smul.u32 16, %s13
      $region44: #{dqn_forward.1} parent=39 // pred_fallthru
        _
    $region40: #{dqn_forward.1} parent=5 // pred_fallthru
      _
    %p237 = scmp.le.s32.totalorder 1, %s13
    %p238 = scmp.lt.s32.totalorder %s13, 3
    %p239 = pnand %p237, %p238
    %p240 = pneg %p239
    // Predicated region
    $region45: #{dqn_forward.1} parent=5 // pred_check
      _
    $region46: #{dqn_forward.1} parent=5 // pred_check_branch
      %242 = sbr.rel (%p239) target = $region48
    $region47: #{dqn_forward.1} parent=5 // pred_region
      %s243 = ssub.s32 %s13, 1
      %s244 = smul.u32 16, %s18
      %p245 = scmp.lt.s32.totalorder %s244, 31
      %s246 = scalar_select %p245, %s244, 31
      %s247 = smul.addr %s246, 4
      %s248 = scalar_lea.vmem %s0, %s247
      %p249 = pneg %p39
      %p250 = pneg %p36
      %p251 = pneg %p60
      %p252 = pneg %p57
      %p253 = pneg %p81
      %p254 = pneg %p78
      %p255 = pneg %p102
      %p256 = pneg %p99
      %p257 = pneg %p123
      %p258 = pneg %p120
      %p259 = pneg %p144
      %p260 = pneg %p141
      %p261 = pneg %p165
      %p262 = pneg %p162
      %p263 = pneg %p191
      %p264 = pneg %p188
      %s265 = smul.u32 16, %s18
      %p266 = scmp.lt.s32.totalorder %s265, 31
      %s267 = scalar_select %p266, %s265, 31
      %s268 = smul.addr %s267, 8
      %s269 = scalar_lea.vmem %s7, %s268
      %s270 = smul.u32 16, %s18
      %p271 = scmp.lt.s32.totalorder %s270, 31
      %s272 = scalar_select %p271, %s270, 31
      %s273 = smul.addr %s272, 4
      %s274 = scalar_lea.vmem %s0, %s273
      %s275 = smul.u32 16, %s18
      %s276 = smul.u32 16, %s18
      %p277 = scmp.lt.s32.totalorder %s276, 31
      %s278 = scalar_select %p277, %s276, 31
      %s279 = smul.addr %s278, 8
      %s280 = scalar_lea.vmem %s7, %s279
      %s281 = smul.u32 16, %s18
      %v282 = vld [vmem:[%s2] sm:$0x1]
      %v283 = vld [vmem:[%s4] sm:$0x1]
      %v284 = vld [vmem:[%s6] sm:$0x1]
      %v285 = vld [vmem:[%s274] sm:$0xf]
      %v286 = vld [vmem:[%s274 + $0x4] sm:$0xf]
      %v287 = vld [vmem:[%s274 + $0x8] sm:$0xf]
      %v288 = vld [vmem:[%s274 + $0xc] sm:$0xf]
      %v289 = vld [vmem:[%s274 + $0x10] sm:$0xf]
      %v290 = vld [vmem:[%s274 + $0x14] sm:$0xf]
      %v291 = vld [vmem:[%s274 + $0x18] sm:$0xf]
      %v292 = vld [vmem:[%s274 + $0x1c] sm:$0xf]
      %v293 = vld [vmem:[%s274 + $0x20] sm:$0xf]
      %v294 = vld [vmem:[%s274 + $0x24] sm:$0xf]
      %v295 = vld [vmem:[%s274 + $0x28] sm:$0xf]
      %v296 = vld [vmem:[%s274 + $0x2c] sm:$0xf]
      %v297 = vld [vmem:[%s274 + $0x30] sm:$0xf]
      %v298 = vld [vmem:[%s274 + $0x34] sm:$0xf]
      %v299 = vld [vmem:[%s274 + $0x38] sm:$0xf]
      %v300 = vld [vmem:[%s274 + $0x3c] sm:$0xf]
      %v301 = vld [vmem:[%s1] sm:$0xf]
      %v302 = vld [vmem:[%s1 + $0x4] sm:$0xf]
      %v303 = vld [vmem:[%s1 + $0x8] sm:$0xf]
      %v304 = vld [vmem:[%s1 + $0xc] sm:$0xf]
      %v305 = vld [vmem:[%s1 + $0x10] sm:$0xf]
      %v306 = vld [vmem:[%s1 + $0x14] sm:$0xf]
      %v307 = vld [vmem:[%s1 + $0x18] sm:$0xf]
      %v308 = vld [vmem:[%s1 + $0x1c] sm:$0xf]
      %v309 = vld [vmem:[%s1 + $0x20] sm:$0xf]
      %v310 = vld [vmem:[%s1 + $0x24] sm:$0xf]
      %v311 = vld [vmem:[%s1 + $0x28] sm:$0xf]
      %v312 = vld [vmem:[%s1 + $0x2c] sm:$0xf]
      %v313 = vld [vmem:[%s1 + $0x30] sm:$0xf]
      %v314 = vld [vmem:[%s1 + $0x34] sm:$0xf]
      %v315 = vld [vmem:[%s1 + $0x38] sm:$0xf]
      %v316 = vld [vmem:[%s1 + $0x3c] sm:$0xf]
      %v318 = vperm.slane %v282, 0
      %v336 = vunpack.c.l.b16 %v285
      %v337 = vunpack.c.l.b16 %v286
      %v338 = vunpack.c.l.b16 %v287
      %v339 = vunpack.c.l.b16 %v288
      %v340 = vunpack.c.l.b16 %v289
      %v341 = vunpack.c.l.b16 %v290
      %v342 = vunpack.c.l.b16 %v291
      %v343 = vunpack.c.l.b16 %v292
      %v344 = vunpack.c.l.b16 %v293
      %v345 = vunpack.c.l.b16 %v294
      %v346 = vunpack.c.l.b16 %v295
      %v347 = vunpack.c.l.b16 %v296
      %v348 = vunpack.c.l.b16 %v297
      %v349 = vunpack.c.l.b16 %v298
      %v350 = vunpack.c.l.b16 %v299
      %v351 = vunpack.c.l.b16 %v300
      %v352 = vpack.c.b16 %v337, %v336
      %v353 = vpack.c.b16 %v339, %v338
      %v354 = vpack.c.b16 %v341, %v340
      %v355 = vpack.c.b16 %v343, %v342
      %v356 = vpack.c.b16 %v345, %v344
      %v357 = vpack.c.b16 %v347, %v346
      %v358 = vpack.c.b16 %v349, %v348
      %v359 = vpack.c.b16 %v351, %v350
      %v384 = vunpack.c.l.b16 %v301
      %v385 = vunpack.c.l.b16 %v302
      %v386 = vunpack.c.l.b16 %v303
      %v387 = vunpack.c.l.b16 %v304
      %v388 = vunpack.c.l.b16 %v305
      %v389 = vunpack.c.l.b16 %v306
      %v390 = vunpack.c.l.b16 %v307
      %v391 = vunpack.c.l.b16 %v308
      %v392 = vunpack.c.l.b16 %v309
      %v393 = vunpack.c.l.b16 %v310
      %v394 = vunpack.c.l.b16 %v311
      %v395 = vunpack.c.l.b16 %v312
      %v396 = vunpack.c.l.b16 %v313
      %v397 = vunpack.c.l.b16 %v314
      %v398 = vunpack.c.l.b16 %v315
      %v399 = vunpack.c.l.b16 %v316
      %v400 = vpack.c.b16 %v385, %v384
      %v401 = vpack.c.b16 %v387, %v386
      %v402 = vpack.c.b16 %v389, %v388
      %v403 = vpack.c.b16 %v391, %v390
      %v404 = vpack.c.b16 %v393, %v392
      %v405 = vpack.c.b16 %v395, %v394
      %v406 = vpack.c.b16 %v397, %v396
      %v407 = vpack.c.b16 %v399, %v398
      %416 = vmatpush.bf16.msra.mxu0 %v407
      %417 = vmatpush.bf16.msra.mxu0 %v406
      %418 = vmatpush.bf16.msra.mxu0 %v405
      %419 = vmatpush.bf16.msra.mxu0 %v404
      %420 = vmatpush.bf16.msra.mxu0 %v403
      %421 = vmatpush.bf16.msra.mxu0 %v402
      %422 = vmatpush.bf16.msra.mxu0 %v401
      %423 = vmatpush.bf16.msra.mxu0 %v400
      %424 = vmatmul.bf16.gmra.mxu0 %v352
      %v425 = vpop.f32.mrf.mxu0
      %v426 = vadd.f32 %v318, %v425
      %v427 = vpop.f32.mrf.mxu0
      %v428 = vadd.f32 %v318, %v427
      %429 = vmatmul.bf16.gmra.mxu0 %v353
      %v430 = vpop.f32.mrf.mxu0
      %v431 = vadd.f32 %v318, %v430
      %v432 = vpop.f32.mrf.mxu0
      %v433 = vadd.f32 %v318, %v432
      %434 = vmatmul.bf16.gmra.mxu0 %v354
      %v435 = vpop.f32.mrf.mxu0
      %v436 = vadd.f32 %v318, %v435
      %v437 = vpop.f32.mrf.mxu0
      %v438 = vadd.f32 %v318, %v437
      %439 = vmatmul.bf16.gmra.mxu0 %v355
      %v440 = vpop.f32.mrf.mxu0
      %v441 = vadd.f32 %v318, %v440
      %v442 = vpop.f32.mrf.mxu0
      %v443 = vadd.f32 %v318, %v442
      %444 = vmatmul.bf16.gmra.mxu0 %v356
      %v445 = vpop.f32.mrf.mxu0
      %v446 = vadd.f32 %v318, %v445
      %v447 = vpop.f32.mrf.mxu0
      %v448 = vadd.f32 %v318, %v447
      %449 = vmatmul.bf16.gmra.mxu0 %v357
      %v450 = vpop.f32.mrf.mxu0
      %v451 = vadd.f32 %v318, %v450
      %v452 = vpop.f32.mrf.mxu0
      %v453 = vadd.f32 %v318, %v452
      %454 = vmatmul.bf16.gmra.mxu0 %v358
      %v455 = vpop.f32.mrf.mxu0
      %v456 = vadd.f32 %v318, %v455
      %v457 = vpop.f32.mrf.mxu0
      %v458 = vadd.f32 %v318, %v457
      %459 = vmatmul.bf16.gmra.mxu0 %v359
      %v460 = vpop.f32.mrf.mxu0
      %v461 = vadd.f32 %v318, %v460
      %v462 = vpop.f32.mrf.mxu0
      %v463 = vadd.f32 %v318, %v462
      %464 = vdwg.mxu0
      %v465 = vmax.f32 %v426, 0.0
      %v466 = vmax.f32 %v428, 0.0
      %v467 = vmax.f32 %v431, 0.0
      %v468 = vmax.f32 %v433, 0.0
      %v469 = vmax.f32 %v436, 0.0
      %v470 = vmax.f32 %v438, 0.0
      %v471 = vmax.f32 %v441, 0.0
      %v472 = vmax.f32 %v443, 0.0
      %v473 = vmax.f32 %v446, 0.0
      %v474 = vmax.f32 %v448, 0.0
      %v475 = vmax.f32 %v451, 0.0
      %v476 = vmax.f32 %v453, 0.0
      %v477 = vmax.f32 %v456, 0.0
      %v478 = vmax.f32 %v458, 0.0
      %v479 = vmax.f32 %v461, 0.0
      %v480 = vmax.f32 %v463, 0.0
      %v481 = vpack.c.bf16 %v466, %v465
      %v482 = vpack.c.bf16 %v468, %v467
      %v483 = vpack.c.bf16 %v470, %v469
      %v484 = vpack.c.bf16 %v472, %v471
      %v485 = vpack.c.bf16 %v474, %v473
      %v486 = vpack.c.bf16 %v476, %v475
      %v487 = vpack.c.bf16 %v478, %v477
      %v488 = vpack.c.bf16 %v480, %v479
      %v489 = vld [vmem:[%s3] sm:$0xf]
      %v490 = vld [vmem:[%s3 + $0x4] sm:$0xf]
      %v491 = vld [vmem:[%s3 + $0x8] sm:$0xf]
      %v492 = vld [vmem:[%s3 + $0xc] sm:$0xf]
      %v493 = vld [vmem:[%s3 + $0x10] sm:$0xf]
      %v494 = vld [vmem:[%s3 + $0x14] sm:$0xf]
      %v495 = vld [vmem:[%s3 + $0x18] sm:$0xf]
      %v496 = vld [vmem:[%s3 + $0x1c] sm:$0xf]
      %v497 = vld [vmem:[%s3 + $0x20] sm:$0xf]
      %v498 = vld [vmem:[%s3 + $0x24] sm:$0xf]
      %v499 = vld [vmem:[%s3 + $0x28] sm:$0xf]
      %v500 = vld [vmem:[%s3 + $0x2c] sm:$0xf]
      %v501 = vld [vmem:[%s3 + $0x30] sm:$0xf]
      %v502 = vld [vmem:[%s3 + $0x34] sm:$0xf]
      %v503 = vld [vmem:[%s3 + $0x38] sm:$0xf]
      %v504 = vld [vmem:[%s3 + $0x3c] sm:$0xf]
      %v506 = vperm.slane %v283, 0
      %v524 = vunpack.c.l.b16 %v489
      %v525 = vunpack.c.l.b16 %v490
      %v526 = vunpack.c.l.b16 %v491
      %v527 = vunpack.c.l.b16 %v492
      %v528 = vunpack.c.l.b16 %v493
      %v529 = vunpack.c.l.b16 %v494
      %v530 = vunpack.c.l.b16 %v495
      %v531 = vunpack.c.l.b16 %v496
      %v532 = vunpack.c.l.b16 %v497
      %v533 = vunpack.c.l.b16 %v498
      %v534 = vunpack.c.l.b16 %v499
      %v535 = vunpack.c.l.b16 %v500
      %v536 = vunpack.c.l.b16 %v501
      %v537 = vunpack.c.l.b16 %v502
      %v538 = vunpack.c.l.b16 %v503
      %v539 = vunpack.c.l.b16 %v504
      %v540 = vpack.c.b16 %v525, %v524
      %v541 = vpack.c.b16 %v527, %v526
      %v542 = vpack.c.b16 %v529, %v528
      %v543 = vpack.c.b16 %v531, %v530
      %v544 = vpack.c.b16 %v533, %v532
      %v545 = vpack.c.b16 %v535, %v534
      %v546 = vpack.c.b16 %v537, %v536
      %v547 = vpack.c.b16 %v539, %v538
      %556 = vmatpush.bf16.msra.mxu0 %v547
      %557 = vmatpush.bf16.msra.mxu0 %v546
      %558 = vmatpush.bf16.msra.mxu0 %v545
      %559 = vmatpush.bf16.msra.mxu0 %v544
      %560 = vmatpush.bf16.msra.mxu0 %v543
      %561 = vmatpush.bf16.msra.mxu0 %v542
      %562 = vmatpush.bf16.msra.mxu0 %v541
      %563 = vmatpush.bf16.msra.mxu0 %v540
      %564 = vmatmul.bf16.gmra.mxu0 %v481
      %v565 = vpop.f32.mrf.mxu0
      %v566 = vadd.f32 %v506, %v565
      %v567 = vpop.f32.mrf.mxu0
      %v568 = vadd.f32 %v506, %v567
      %569 = vmatmul.bf16.gmra.mxu0 %v482
      %v570 = vpop.f32.mrf.mxu0
      %v571 = vadd.f32 %v506, %v570
      %v572 = vpop.f32.mrf.mxu0
      %v573 = vadd.f32 %v506, %v572
      %574 = vmatmul.bf16.gmra.mxu0 %v483
      %v575 = vpop.f32.mrf.mxu0
      %v576 = vadd.f32 %v506, %v575
      %v577 = vpop.f32.mrf.mxu0
      %v578 = vadd.f32 %v506, %v577
      %579 = vmatmul.bf16.gmra.mxu0 %v484
      %v580 = vpop.f32.mrf.mxu0
      %v581 = vadd.f32 %v506, %v580
      %v582 = vpop.f32.mrf.mxu0
      %v583 = vadd.f32 %v506, %v582
      %584 = vmatmul.bf16.gmra.mxu0 %v485
      %v585 = vpop.f32.mrf.mxu0
      %v586 = vadd.f32 %v506, %v585
      %v587 = vpop.f32.mrf.mxu0
      %v588 = vadd.f32 %v506, %v587
      %589 = vmatmul.bf16.gmra.mxu0 %v486
      %v590 = vpop.f32.mrf.mxu0
      %v591 = vadd.f32 %v506, %v590
      %v592 = vpop.f32.mrf.mxu0
      %v593 = vadd.f32 %v506, %v592
      %594 = vmatmul.bf16.gmra.mxu0 %v487
      %v595 = vpop.f32.mrf.mxu0
      %v596 = vadd.f32 %v506, %v595
      %v597 = vpop.f32.mrf.mxu0
      %v598 = vadd.f32 %v506, %v597
      %599 = vmatmul.bf16.gmra.mxu0 %v488
      %v600 = vpop.f32.mrf.mxu0
      %v601 = vadd.f32 %v506, %v600
      %v602 = vpop.f32.mrf.mxu0
      %v603 = vadd.f32 %v506, %v602
      %604 = vdwg.mxu0
      %v605 = vmax.f32 %v566, 0.0
      %v606 = vmax.f32 %v568, 0.0
      %v607 = vmax.f32 %v571, 0.0
      %v608 = vmax.f32 %v573, 0.0
      %v609 = vmax.f32 %v576, 0.0
      %v610 = vmax.f32 %v578, 0.0
      %v611 = vmax.f32 %v581, 0.0
      %v612 = vmax.f32 %v583, 0.0
      %v613 = vmax.f32 %v586, 0.0
      %v614 = vmax.f32 %v588, 0.0
      %v615 = vmax.f32 %v591, 0.0
      %v616 = vmax.f32 %v593, 0.0
      %v617 = vmax.f32 %v596, 0.0
      %v618 = vmax.f32 %v598, 0.0
      %v619 = vmax.f32 %v601, 0.0
      %v620 = vmax.f32 %v603, 0.0
      %v621 = vpack.c.bf16 %v606, %v605
      %v622 = vpack.c.bf16 %v608, %v607
      %v623 = vpack.c.bf16 %v610, %v609
      %v624 = vpack.c.bf16 %v612, %v611
      %v625 = vpack.c.bf16 %v614, %v613
      %v626 = vpack.c.bf16 %v616, %v615
      %v627 = vpack.c.bf16 %v618, %v617
      %v628 = vpack.c.bf16 %v620, %v619
      %v629 = vld [vmem:[%s5] sm:$0xf]
      %v630 = vld [vmem:[%s5 + $0x4] sm:$0xf]
      %v631 = vld [vmem:[%s5 + $0x8] sm:$0xf]
      %v632 = vld [vmem:[%s5 + $0xc] sm:$0xf]
      %v633 = vld [vmem:[%s5 + $0x10] sm:$0xf]
      %v634 = vld [vmem:[%s5 + $0x14] sm:$0xf]
      %v635 = vld [vmem:[%s5 + $0x18] sm:$0xf]
      %v636 = vld [vmem:[%s5 + $0x1c] sm:$0xf]
      %v637 = vld [vmem:[%s5 + $0x20] sm:$0xf]
      %v638 = vld [vmem:[%s5 + $0x24] sm:$0xf]
      %v639 = vld [vmem:[%s5 + $0x28] sm:$0xf]
      %v640 = vld [vmem:[%s5 + $0x2c] sm:$0xf]
      %v641 = vld [vmem:[%s5 + $0x30] sm:$0xf]
      %v642 = vld [vmem:[%s5 + $0x34] sm:$0xf]
      %v643 = vld [vmem:[%s5 + $0x38] sm:$0xf]
      %v644 = vld [vmem:[%s5 + $0x3c] sm:$0xf]
      %v646 = vperm.slane %v284, 0
      %v664 = vunpack.c.l.b16 %v629
      %v665 = vunpack.c.l.b16 %v630
      %v666 = vunpack.c.l.b16 %v631
      %v667 = vunpack.c.l.b16 %v632
      %v668 = vunpack.c.l.b16 %v633
      %v669 = vunpack.c.l.b16 %v634
      %v670 = vunpack.c.l.b16 %v635
      %v671 = vunpack.c.l.b16 %v636
      %v672 = vunpack.c.l.b16 %v637
      %v673 = vunpack.c.l.b16 %v638
      %v674 = vunpack.c.l.b16 %v639
      %v675 = vunpack.c.l.b16 %v640
      %v676 = vunpack.c.l.b16 %v641
      %v677 = vunpack.c.l.b16 %v642
      %v678 = vunpack.c.l.b16 %v643
      %v679 = vunpack.c.l.b16 %v644
      %v680 = vpack.c.b16 %v665, %v664
      %v681 = vpack.c.b16 %v667, %v666
      %v682 = vpack.c.b16 %v669, %v668
      %v683 = vpack.c.b16 %v671, %v670
      %v684 = vpack.c.b16 %v673, %v672
      %v685 = vpack.c.b16 %v675, %v674
      %v686 = vpack.c.b16 %v677, %v676
      %v687 = vpack.c.b16 %v679, %v678
      %696 = vmatpush.bf16.msra.mxu0 %v687
      %697 = vmatpush.bf16.msra.mxu0 %v686
      %698 = vmatpush.bf16.msra.mxu0 %v685
      %699 = vmatpush.bf16.msra.mxu0 %v684
      %700 = vmatpush.bf16.msra.mxu0 %v683
      %701 = vmatpush.bf16.msra.mxu0 %v682
      %702 = vmatpush.bf16.msra.mxu0 %v681
      %703 = vmatpush.bf16.msra.mxu0 %v680
      %704 = vmatmul.bf16.gmra.mxu0 %v621
      %v705 = vpop.f32.mrf.mxu0
      %v706 = vadd.f32 %v646, %v705
      %v707 = vpop.f32.mrf.mxu0
      %v708 = vadd.f32 %v646, %v707
      %709 = vmatmul.bf16.gmra.mxu0 %v622
      %v710 = vpop.f32.mrf.mxu0
      %v711 = vadd.f32 %v646, %v710
      %v712 = vpop.f32.mrf.mxu0
      %v713 = vadd.f32 %v646, %v712
      %714 = vmatmul.bf16.gmra.mxu0 %v623
      %v715 = vpop.f32.mrf.mxu0
      %v716 = vadd.f32 %v646, %v715
      %v717 = vpop.f32.mrf.mxu0
      %v718 = vadd.f32 %v646, %v717
      %719 = vmatmul.bf16.gmra.mxu0 %v624
      %v720 = vpop.f32.mrf.mxu0
      %v721 = vadd.f32 %v646, %v720
      %v722 = vpop.f32.mrf.mxu0
      %v723 = vadd.f32 %v646, %v722
      %724 = vmatmul.bf16.gmra.mxu0 %v625
      %v725 = vpop.f32.mrf.mxu0
      %v726 = vadd.f32 %v646, %v725
      %v727 = vpop.f32.mrf.mxu0
      %v728 = vadd.f32 %v646, %v727
      %729 = vmatmul.bf16.gmra.mxu0 %v626
      %v730 = vpop.f32.mrf.mxu0
      %v731 = vadd.f32 %v646, %v730
      %v732 = vpop.f32.mrf.mxu0
      %v733 = vadd.f32 %v646, %v732
      %734 = vmatmul.bf16.gmra.mxu0 %v627
      %v735 = vpop.f32.mrf.mxu0
      %v736 = vadd.f32 %v646, %v735
      %v737 = vpop.f32.mrf.mxu0
      %v738 = vadd.f32 %v646, %v737
      %739 = vmatmul.bf16.gmra.mxu0 %v628
      %v740 = vpop.f32.mrf.mxu0
      %v741 = vadd.f32 %v646, %v740
      %v742 = vpop.f32.mrf.mxu0
      %v743 = vadd.f32 %v646, %v742
      %744 = vdwg.mxu0
      %745 = vst [vmem:[%s280] sm:$0xff] %v706
      %746 = vst [vmem:[%s280 + $0x8] sm:$0xff] %v708
      %747 = vst [vmem:[%s280 + $0x10] sm:$0xff] %v711
      %748 = vst [vmem:[%s280 + $0x18] sm:$0xff] %v713
      %749 = vst [vmem:[%s280 + $0x20] sm:$0xff] %v716
      %750 = vst [vmem:[%s280 + $0x28] sm:$0xff] %v718
      %751 = vst [vmem:[%s280 + $0x30] sm:$0xff] %v721
      %752 = vst [vmem:[%s280 + $0x38] sm:$0xff] %v723
      %753 = vst [vmem:[%s280 + $0x40] sm:$0xff] %v726
      %754 = vst [vmem:[%s280 + $0x48] sm:$0xff] %v728
      %755 = vst [vmem:[%s280 + $0x50] sm:$0xff] %v731
      %756 = vst [vmem:[%s280 + $0x58] sm:$0xff] %v733
      %757 = vst [vmem:[%s280 + $0x60] sm:$0xff] %v736
      %758 = vst [vmem:[%s280 + $0x68] sm:$0xff] %v738
      %759 = vst [vmem:[%s280 + $0x70] sm:$0xff] %v741
      %760 = vst [vmem:[%s280 + $0x78] sm:$0xff] %v743
      %s761 = smul.u32 16, %s18
      %p762 = scmp.lt.s32.totalorder %s761, 31
      %s763 = scalar_select %p762, %s761, 31
      %s764 = smul.addr %s763, 8
      %s765 = scalar_lea.vmem %s7, %s764
      // Predicated region
      $region49: #{dqn_forward.1} parent=47 // pred_check
        %p766 = pneg %p188
      $region50: #{dqn_forward.1} parent=47 // pred_check_branch
        %768 = sbr.rel (%p766) target = $region52
      $region51: #{dqn_forward.1} parent=47 // pred_region
        %s769 = smul.u32 16, %s18
      $region52: #{dqn_forward.1} parent=47 // pred_fallthru
        _
    $region48: #{dqn_forward.1} parent=5 // pred_fallthru
      _
    %p770 = scmp.le.s32.totalorder 2, %s13
    // Predicated region
    $region53: #{dqn_forward.1} parent=5 // pred_check
      %p771 = pneg %p770
    $region54: #{dqn_forward.1} parent=5 // pred_check_branch
      %773 = sbr.rel (%p771) target = $region56
    $region55: #{dqn_forward.1} parent=5 // pred_region
      %s774 = ssub.s32 %s13, 2
      // Predicated region
      $region57: #{dqn_forward.1} parent=55 // pred_check
        %p775 = pneg %p194
      $region58: #{dqn_forward.1} parent=55 // pred_check_branch
        %777 = sbr.rel (%p775) target = $region60
      $region59: #{dqn_forward.1} parent=55 // pred_region
        %s778 = smul.u32 16, %s19
        %p779 = scmp.lt.s32.totalorder %s778, 31
        %s780 = scalar_select %p779, %s778, 31
        %s781 = smul.addr %s780, 8
        %s782 = scalar_lea.vmem %s7, %s781
      $region60: #{dqn_forward.1} parent=55 // pred_fallthru
        _
    $region56: #{dqn_forward.1} parent=5 // pred_fallthru
      _
  $region6: #{dqn_forward.1} parent=0 // loop_footer
    %s17 = sadd.s32 1, %s13
  $region7: #{dqn_forward.1} parent=0 // loop_footer_branch
    %12 = sbr.rel target = $region3
  $region8: #{dqn_forward.1} parent=0 // loop_exit
    _

</llo_original>
